<compile_context>
chip_gen: v7x
topology: tpu7x:2x2x1
jax: 0.10.0
libtpu: 0.0.40
codegen_flags: <defaults>
</compile_context>

<pallas_src>
import jax
import jax.numpy as jnp
from jax.experimental import pallas as pl
from jax.experimental.pallas import tpu as pltpu

EPS = 1e-5  # nn.GroupNorm default eps


def make_resblock_kernel(C, L, G, N, conv_dtype):
    inv_n = 1.0 / float((C // G) * L)   # elements per (group, sample)

    def kernel(x_ref, m2_ref, m2t_ref, s_ref, st_ref, p_ref, w1_ref, w2_ref, o_ref):
        x = x_ref[...].astype(jnp.float32)        # (C, N)  N = batch_block * L
        M2 = m2_ref[...]                          # (2G, 2C) block-diag group one-hot
        M2T = m2t_ref[...]                        # (2C, 2G)
        S = s_ref[...]                            # (N, Bblk) sample one-hot
        ST = st_ref[...]                          # (Bblk, N)
        P = p_ref[...]                            # (C, 8) packed per-channel params

        g1, b1, bc1 = P[:, 0:1], P[:, 1:2], P[:, 2:3]
        g2, b2, bc2 = P[:, 3:4], P[:, 4:5], P[:, 5:6]

        # Hoisted conv boundary masks (per-sample, reused by both convs).
        pos = jax.lax.broadcasted_iota(jnp.int32, (C, N), 1) % L
        left_ok = (pos >= 1).astype(jnp.float32)        # x[l-1] exists within sample
        right_ok = (pos <= L - 2).astype(jnp.float32)   # x[l+1] exists within sample

        def group_norm(v, gamma, beta):
            # Per-(group, sample) stats via one-hot matmuls (reshape-free, MXU path).
            u = jnp.concatenate([v, v * v], axis=0)                            # (2C, N)
            s = jnp.dot(M2, u, preferred_element_type=jnp.float32)             # (2G, N)
            sums = jnp.dot(s, S, preferred_element_type=jnp.float32)           # (2G, Bblk)
            mean = sums[:G] * inv_n
            # E[x^2]-E[x]^2 in f32; fine at these magnitudes (post-norm activations).
            var = sums[G:] * inv_n - mean * mean
            inv = jax.lax.rsqrt(var + EPS)
            stats = jnp.concatenate([mean, inv], axis=0)                       # (2G, Bblk)
            stats_n = jnp.dot(stats, ST, preferred_element_type=jnp.float32)   # (2G, N)
            stats_c = jnp.dot(M2T, stats_n, preferred_element_type=jnp.float32)  # (2C, N)
            mean_c, inv_c = stats_c[:C], stats_c[C:]
            return (v - mean_c) * (inv_c * gamma) + beta

        def silu(v):
            return v * jax.nn.sigmoid(v)

        def conv3(v, w_ref_, bias):
            # Conv1d(k=3, pad=1) fused into a single MXU call.
            vm1 = left_ok * pltpu.roll(v, shift=1, axis=1)        # x[l-1] (0 at sample start)
            vp1 = right_ok * pltpu.roll(v, shift=N - 1, axis=1)   # x[l+1] (0 at sample end)
            stacked = jnp.concatenate([vm1, v, vp1], axis=0).astype(conv_dtype)  # (3C, N)
            y = jnp.dot(w_ref_[...].astype(conv_dtype), stacked,
                        preferred_element_type=jnp.float32)       # (C, N), f32 accum
            return y + bias

        # in_layers: GroupNorm -> SiLU -> Conv1d(k=3, pad=1)
        h = conv3(silu(group_norm(x, g1, b1)), w1_ref, bc1)
        # out_layers: GroupNorm -> SiLU -> Dropout(identity) -> Conv1d(k=3, pad=1)
        h = conv3(silu(group_norm(h, g2, b2)), w2_ref, bc2)
        # skip_connection = Identity (out_channels == channels)
        o_ref[...] = (x + h).astype(o_ref.dtype)

    return kernel


def _choose_batch_block(B, L):
    # Prefer several samples per grid step with a lane-dense (multiple-of-128) block;
    # fall back to the whole batch in one step for small problems.
    if L % 128 == 0:
        for bb in (8, 4, 2, 1):
            if B % bb == 0:
                return bb
    for bb in range(B, 0, -1):
        if B % bb == 0 and (bb * L) % 128 == 0:
            return bb
    return B


def resblock_forward(x, params, *, conv_dtype=jnp.float32, batch_block=None):
    B, C, L = x.shape
    G = params["groups"]
    N_total = B * L
    if batch_block is None:
        batch_block = _choose_batch_block(B, L)
    assert B % batch_block == 0
    Nblk = batch_block * L
    assert Nblk == N_total or Nblk % 128 == 0, "lane block must be full or a 128-multiple"

    # Layout plumbing (wrapper side): fold batch into the lane axis.
    x2 = jnp.transpose(x, (1, 0, 2)).reshape(C, N_total)                     # (C, B*L)

    # Constant one-hot matrices.
    cpg = C // G
    M = (jnp.arange(C)[None, :] // cpg == jnp.arange(G)[:, None]).astype(jnp.float32)  # (G, C)
    M2 = jnp.zeros((2 * G, 2 * C), jnp.float32).at[:G, :C].set(M).at[G:, C:].set(M)
    M2T = M2.T
    S = (jnp.arange(Nblk)[:, None] // L
         == jnp.arange(batch_block)[None, :]).astype(jnp.float32)           # (Nblk, Bblk)
    ST = S.T

    # Pack the six (C,1) parameters into a single (C, 8) array -> one DMA.
    P = jnp.concatenate([params["g1"], params["b1"], params["bc1"],
                         params["g2"], params["b2"], params["bc2"],
                         jnp.zeros((C, 2), jnp.float32)], axis=1)

    # Fused conv weights: (Cout, Cin, K) -> (Cout, 3*Cin), column blocks [k=0|k=1|k=2].
    W1 = jnp.transpose(params["w1"], (0, 2, 1)).reshape(C, 3 * C).astype(conv_dtype)
    W2 = jnp.transpose(params["w2"], (0, 2, 1)).reshape(C, 3 * C).astype(conv_dtype)

    kernel = make_resblock_kernel(C, L, G, Nblk, conv_dtype)

    def const_spec(shape):
        return pl.BlockSpec(shape, lambda i, _n=len(shape): (0,) * _n)

    out2 = pl.pallas_call(
        kernel,
        out_shape=jax.ShapeDtypeStruct((C, N_total), x.dtype),
        grid=(B // batch_block,),
        in_specs=[
            pl.BlockSpec((C, Nblk), lambda i: (0, i)),   # activations, Bblk samples/step
            const_spec((2 * G, 2 * C)),                  # M2
            const_spec((2 * C, 2 * G)),                  # M2.T
            const_spec((Nblk, batch_block)),             # S
            const_spec((batch_block, Nblk)),             # S.T
            const_spec((C, 8)),                          # packed gamma/beta/bias params
            const_spec((C, 3 * C)),                      # conv1 fused weight
            const_spec((C, 3 * C)),                      # conv2 fused weight
        ],
        out_specs=pl.BlockSpec((C, Nblk), lambda i: (0, i)),
        compiler_params=pltpu.CompilerParams(
            dimension_semantics=("parallel",),
            vmem_limit_bytes=48 * 1024 * 1024,   # above 16/32 MiB scoped defaults, v7x-safe
        ),
    )(x2, M2, M2T, S, ST, P, W1, W2)

    return out2.reshape(C, B, L).transpose(1, 0, 2)


# ----------------------- plain-JAX reference (for checking) -----------------------
def ref_group_norm(x, gamma, beta, G):
    B, C, L = x.shape
    xg = x.reshape(B, G, (C // G) * L)
    mean = xg.mean(axis=2, keepdims=True)
    var = xg.var(axis=2, keepdims=True)
    xn = ((xg - mean) / jnp.sqrt(var + EPS)).reshape(B, C, L)
    return xn * gamma.reshape(1, C, 1) + beta.reshape(1, C, 1)


def ref_conv3(x, w, b):
    y = jax.lax.conv_general_dilated(
        x, w, window_strides=(1,), padding=[(1, 1)],
        dimension_numbers=("NCH", "OIH", "NCH"))
    return y + b.reshape(1, -1, 1)


def ref_forward(x, p, G):
    h = ref_group_norm(x, p["g1"], p["b1"], G)
    h = h * jax.nn.sigmoid(h)
    h = ref_conv3(h, p["w1"], p["bc1"])
    h = ref_group_norm(h, p["g2"], p["b2"], G)
    h = h * jax.nn.sigmoid(h)
    h = ref_conv3(h, p["w2"], p["bc2"])
    return x + h


def init_params(key, C, G):
    ks = jax.random.split(key, 8)
    s = 0.1
    return {
        "groups": G,
        "g1": 1.0 + s * jax.random.normal(ks[0], (C, 1), jnp.float32),
        "b1": s * jax.random.normal(ks[1], (C, 1), jnp.float32),
        "w1": s * jax.random.normal(ks[2], (C, C, 3), jnp.float32),   # (Cout, Cin, K)
        "bc1": s * jax.random.normal(ks[3], (C, 1), jnp.float32),
        "g2": 1.0 + s * jax.random.normal(ks[4], (C, 1), jnp.float32),
        "b2": s * jax.random.normal(ks[5], (C, 1), jnp.float32),
        "w2": s * jax.random.normal(ks[6], (C, C, 3), jnp.float32),   # zero_module'd in torch
        "bc2": s * jax.random.normal(ks[7], (C, 1), jnp.float32),
    }


if __name__ == "__main__":
    B, C, L = 2, 16, 16          # channels=16 -> normalization() picks groups=8
    G = 8
    key = jax.random.PRNGKey(0)
    kx, kp = jax.random.split(key)
    x = jax.random.normal(kx, (B, C, L), jnp.float32)
    params = init_params(kp, C, G)

    ref = jax.block_until_ready(ref_forward(x, params, G))

    # f32 conv operands: tight numerical check.
    out = jax.block_until_ready(resblock_forward(x, params))
    assert out.shape == (B, C, L) and out.dtype == x.dtype
    err = float(jnp.max(jnp.abs(out - ref)))
    assert jnp.allclose(out, ref, atol=1e-4, rtol=1e-4), err

    # bf16 conv operands (MXU-native on v5e/v6e/v7x), f32 accumulation: looser check.
    out_bf16 = jax.block_until_ready(
        resblock_forward(x, params, conv_dtype=jnp.bfloat16))
    err_bf16 = float(jnp.max(jnp.abs(out_bf16 - ref)))
    assert jnp.allclose(out_bf16, ref, atol=1e-1, rtol=1e-1), err_bf16

    print("KERNEL_OK")
</pallas_src>

<mosaic_0001>
module attributes {stable_mosaic.version = 11 : i64} {
  func.func @kernel(%arg0: i32, %arg1: memref<16x32xf32, #tpu.memory_space<vmem>>, %arg2: memref<16x32xf32, #tpu.memory_space<vmem>>, %arg3: memref<32x16xf32, #tpu.memory_space<vmem>>, %arg4: memref<32x2xf32, #tpu.memory_space<vmem>>, %arg5: memref<2x32xf32, #tpu.memory_space<vmem>>, %arg6: memref<16x8xf32, #tpu.memory_space<vmem>>, %arg7: memref<16x48xf32, #tpu.memory_space<vmem>>, %arg8: memref<16x48xf32, #tpu.memory_space<vmem>>, %arg9: memref<16x32xf32, #tpu.memory_space<vmem>>) attributes {dimension_semantics = [#tpu.dimension_semantics<parallel>], iteration_bounds = array<i64: 1>, scalar_prefetch = 0 : i64, scratch_operands = 0 : i64, tpu.core_type = #tpu.core_type<tc>, window_params = [{transform_indices = @transform_0, window_bounds = array<i64: 16, 32>}, {pipeline_mode = #tpu.pipeline_mode<synchronous>, transform_indices = @transform_1, window_bounds = array<i64: 16, 32>}, {pipeline_mode = #tpu.pipeline_mode<synchronous>, transform_indices = @transform_2, window_bounds = array<i64: 32, 16>}, {pipeline_mode = #tpu.pipeline_mode<synchronous>, transform_indices = @transform_3, window_bounds = array<i64: 32, 2>}, {pipeline_mode = #tpu.pipeline_mode<synchronous>, transform_indices = @transform_4, window_bounds = array<i64: 2, 32>}, {pipeline_mode = #tpu.pipeline_mode<synchronous>, transform_indices = @transform_5, window_bounds = array<i64: 16, 8>}, {pipeline_mode = #tpu.pipeline_mode<synchronous>, transform_indices = @transform_6, window_bounds = array<i64: 16, 48>}, {pipeline_mode = #tpu.pipeline_mode<synchronous>, transform_indices = @transform_7, window_bounds = array<i64: 16, 48>}, {transform_indices = @transform_8, window_bounds = array<i64: 16, 32>}]} {
    %c0 = arith.constant 0 : index
    %c0_0 = arith.constant 0 : index
    %0 = vector.load %arg1[%c0, %c0_0] : memref<16x32xf32, #tpu.memory_space<vmem>>, vector<16x32xf32>
    %c0_1 = arith.constant 0 : index
    %c0_2 = arith.constant 0 : index
    %1 = vector.load %arg2[%c0_1, %c0_2] : memref<16x32xf32, #tpu.memory_space<vmem>>, vector<16x32xf32>
    %c0_3 = arith.constant 0 : index
    %c0_4 = arith.constant 0 : index
    %2 = vector.load %arg3[%c0_3, %c0_4] : memref<32x16xf32, #tpu.memory_space<vmem>>, vector<32x16xf32>
    %c0_5 = arith.constant 0 : index
    %c0_6 = arith.constant 0 : index
    %3 = vector.load %arg4[%c0_5, %c0_6] : memref<32x2xf32, #tpu.memory_space<vmem>>, vector<32x2xf32>
    %c0_7 = arith.constant 0 : index
    %c0_8 = arith.constant 0 : index
    %4 = vector.load %arg5[%c0_7, %c0_8] : memref<2x32xf32, #tpu.memory_space<vmem>>, vector<2x32xf32>
    %c0_9 = arith.constant 0 : index
    %c0_10 = arith.constant 0 : index
    %5 = vector.load %arg6[%c0_9, %c0_10] : memref<16x8xf32, #tpu.memory_space<vmem>>, vector<16x8xf32>
    %6 = vector.extract_strided_slice %5 {offsets = [0, 0], sizes = [16, 1], strides = [1, 1]} : vector<16x8xf32> to vector<16x1xf32>
    %7 = vector.extract_strided_slice %5 {offsets = [0, 1], sizes = [16, 1], strides = [1, 1]} : vector<16x8xf32> to vector<16x1xf32>
    %8 = vector.extract_strided_slice %5 {offsets = [0, 2], sizes = [16, 1], strides = [1, 1]} : vector<16x8xf32> to vector<16x1xf32>
    %9 = vector.extract_strided_slice %5 {offsets = [0, 3], sizes = [16, 1], strides = [1, 1]} : vector<16x8xf32> to vector<16x1xf32>
    %10 = vector.extract_strided_slice %5 {offsets = [0, 4], sizes = [16, 1], strides = [1, 1]} : vector<16x8xf32> to vector<16x1xf32>
    %11 = vector.extract_strided_slice %5 {offsets = [0, 5], sizes = [16, 1], strides = [1, 1]} : vector<16x8xf32> to vector<16x1xf32>
    %12 = tpu.iota {dimensions = array<i32: 1>} : vector<16x32xi32>
    %c16_i32 = arith.constant 16 : i32
    %c0_i32 = arith.constant 0 : i32
    %13 = arith.cmpi eq, %c16_i32, %c0_i32 : i32
    %c1_i32 = arith.constant 1 : i32
    %14 = arith.select %13, %c1_i32, %c16_i32 : i32
    %15 = vector.broadcast %14 : i32 to vector<16x32xi32>
    %16 = arith.remsi %12, %15 : vector<16x32xi32>
    %c0_i32_11 = arith.constant 0 : i32
    %17 = vector.broadcast %c0_i32_11 : i32 to vector<16x32xi32>
    %18 = arith.cmpi ne, %16, %17 : vector<16x32xi32>
    %c0_i32_12 = arith.constant 0 : i32
    %19 = vector.broadcast %c0_i32_12 : i32 to vector<16x32xi32>
    %20 = arith.cmpi slt, %16, %19 : vector<16x32xi32>
    %c0_i32_13 = arith.constant 0 : i32
    %21 = arith.cmpi slt, %14, %c0_i32_13 : i32
    %22 = vector.broadcast %21 : i1 to vector<16x32xi1>
    %23 = vector.broadcast %22 : vector<16x32xi1> to vector<16x32xi1>
    %24 = arith.xori %20, %23 : vector<16x32xi1>
    %25 = arith.andi %24, %18 : vector<16x32xi1>
    %26 = vector.broadcast %14 : i32 to vector<16x32xi32>
    %27 = arith.addi %16, %26 : vector<16x32xi32>
    %28 = arith.select %25, %27, %16 : vector<16x32xi1>, vector<16x32xi32>
    %c1_i32_14 = arith.constant 1 : i32
    %29 = vector.broadcast %c1_i32_14 : i32 to vector<16x32xi32>
    %30 = arith.cmpi sge, %28, %29 : vector<16x32xi32>
    %31 = arith.extui %30 : vector<16x32xi1> to vector<16x32xi32>
    %32 = arith.sitofp %31 : vector<16x32xi32> to vector<16x32xf32>
    %c14_i32 = arith.constant 14 : i32
    %33 = vector.broadcast %c14_i32 : i32 to vector<16x32xi32>
    %34 = arith.cmpi sle, %28, %33 : vector<16x32xi32>
    %35 = arith.extui %34 : vector<16x32xi1> to vector<16x32xi32>
    %36 = arith.sitofp %35 : vector<16x32xi32> to vector<16x32xf32>
    %37 = arith.mulf %0, %0 : vector<16x32xf32>
    %38 = tpu.concatenate %0, %37 in 0 : vector<16x32xf32>, vector<16x32xf32> -> vector<32x32xf32>
    %cst = arith.constant dense<0.000000e+00> : vector<16x32xf32>
    %39 = tpu.matmul %1, %38, %cst {dimension_numbers = #tpu.dot_dimension_numbers<[1], [0], [0], [1], [0, 0, 1, 1], [], []>} : vector<16x32xf32>, vector<32x32xf32>, vector<16x32xf32> -> vector<16x32xf32>
    %cst_15 = arith.constant dense<0.000000e+00> : vector<16x2xf32>
    %40 = tpu.matmul %39, %3, %cst_15 {dimension_numbers = #tpu.dot_dimension_numbers<[1], [0], [0], [1], [0, 0, 1, 1], [], []>} : vector<16x32xf32>, vector<32x2xf32>, vector<16x2xf32> -> vector<16x2xf32>
    %41 = vector.extract_strided_slice %40 {offsets = [0, 0], sizes = [8, 2], strides = [1, 1]} : vector<16x2xf32> to vector<8x2xf32>
    %cst_16 = arith.constant 3.125000e-02 : f32
    %42 = vector.broadcast %cst_16 : f32 to vector<8x2xf32>
    %43 = arith.mulf %41, %42 : vector<8x2xf32>
    %44 = vector.extract_strided_slice %40 {offsets = [8, 0], sizes = [8, 2], strides = [1, 1]} : vector<16x2xf32> to vector<8x2xf32>
    %cst_17 = arith.constant 3.125000e-02 : f32
    %45 = vector.broadcast %cst_17 : f32 to vector<8x2xf32>
    %46 = arith.mulf %44, %45 : vector<8x2xf32>
    %47 = arith.mulf %43, %43 : vector<8x2xf32>
    %48 = arith.subf %46, %47 : vector<8x2xf32>
    %cst_18 = arith.constant 9.99999974E-6 : f32
    %49 = vector.broadcast %cst_18 : f32 to vector<8x2xf32>
    %50 = arith.addf %48, %49 : vector<8x2xf32>
    %51 = math.rsqrt %50 : vector<8x2xf32>
    %52 = tpu.concatenate %43, %51 in 0 : vector<8x2xf32>, vector<8x2xf32> -> vector<16x2xf32>
    %cst_19 = arith.constant dense<0.000000e+00> : vector<16x32xf32>
    %53 = tpu.matmul %52, %4, %cst_19 {dimension_numbers = #tpu.dot_dimension_numbers<[1], [0], [0], [1], [0, 0, 1, 1], [], []>} : vector<16x2xf32>, vector<2x32xf32>, vector<16x32xf32> -> vector<16x32xf32>
    %cst_20 = arith.constant dense<0.000000e+00> : vector<32x32xf32>
    %54 = tpu.matmul %2, %53, %cst_20 {dimension_numbers = #tpu.dot_dimension_numbers<[1], [0], [0], [1], [0, 0, 1, 1], [], []>} : vector<32x16xf32>, vector<16x32xf32>, vector<32x32xf32> -> vector<32x32xf32>
    %55 = vector.extract_strided_slice %54 {offsets = [0, 0], sizes = [16, 32], strides = [1, 1]} : vector<32x32xf32> to vector<16x32xf32>
    %56 = vector.extract_strided_slice %54 {offsets = [16, 0], sizes = [16, 32], strides = [1, 1]} : vector<32x32xf32> to vector<16x32xf32>
    %57 = arith.subf %0, %55 : vector<16x32xf32>
    %58 = vector.broadcast %6 : vector<16x1xf32> to vector<16x32xf32>
    %59 = arith.mulf %56, %58 : vector<16x32xf32>
    %60 = arith.mulf %57, %59 : vector<16x32xf32>
    %61 = vector.broadcast %7 : vector<16x1xf32> to vector<16x32xf32>
    %62 = arith.addf %60, %61 : vector<16x32xf32>
    %63 = arith.negf %62 : vector<16x32xf32>
    %64 = math.exp %63 : vector<16x32xf32>
    %cst_21 = arith.constant 1.000000e+00 : f32
    %65 = vector.broadcast %cst_21 : f32 to vector<16x32xf32>
    %66 = arith.addf %65, %64 : vector<16x32xf32>
    %67 = arith.divf %65, %66 : vector<16x32xf32>
    %68 = arith.mulf %62, %67 : vector<16x32xf32>
    %c1_i32_22 = arith.constant 1 : i32
    %69 = tpu.dynamic_rotate %68 by %c1_i32_22 dim 1 : vector<16x32xf32>, i32 -> vector<16x32xf32>
    %70 = arith.mulf %32, %69 : vector<16x32xf32>
    %c31_i32 = arith.constant 31 : i32
    %71 = tpu.dynamic_rotate %68 by %c31_i32 dim 1 : vector<16x32xf32>, i32 -> vector<16x32xf32>
    %72 = arith.mulf %36, %71 : vector<16x32xf32>
    %73 = tpu.concatenate %70, %68, %72 in 0 : vector<16x32xf32>, vector<16x32xf32>, vector<16x32xf32> -> vector<48x32xf32>
    %c0_23 = arith.constant 0 : index
    %c0_24 = arith.constant 0 : index
    %74 = vector.load %arg7[%c0_23, %c0_24] : memref<16x48xf32, #tpu.memory_space<vmem>>, vector<16x48xf32>
    %cst_25 = arith.constant dense<0.000000e+00> : vector<16x32xf32>
    %75 = tpu.matmul %74, %73, %cst_25 {dimension_numbers = #tpu.dot_dimension_numbers<[1], [0], [0], [1], [0, 0, 1, 1], [], []>} : vector<16x48xf32>, vector<48x32xf32>, vector<16x32xf32> -> vector<16x32xf32>
    %76 = vector.broadcast %8 : vector<16x1xf32> to vector<16x32xf32>
    %77 = arith.addf %75, %76 : vector<16x32xf32>
    %78 = arith.mulf %77, %77 : vector<16x32xf32>
    %79 = tpu.concatenate %77, %78 in 0 : vector<16x32xf32>, vector<16x32xf32> -> vector<32x32xf32>
    %cst_26 = arith.constant dense<0.000000e+00> : vector<16x32xf32>
    %80 = tpu.matmul %1, %79, %cst_26 {dimension_numbers = #tpu.dot_dimension_numbers<[1], [0], [0], [1], [0, 0, 1, 1], [], []>} : vector<16x32xf32>, vector<32x32xf32>, vector<16x32xf32> -> vector<16x32xf32>
    %cst_27 = arith.constant dense<0.000000e+00> : vector<16x2xf32>
    %81 = tpu.matmul %80, %3, %cst_27 {dimension_numbers = #tpu.dot_dimension_numbers<[1], [0], [0], [1], [0, 0, 1, 1], [], []>} : vector<16x32xf32>, vector<32x2xf32>, vector<16x2xf32> -> vector<16x2xf32>
    %82 = vector.extract_strided_slice %81 {offsets = [0, 0], sizes = [8, 2], strides = [1, 1]} : vector<16x2xf32> to vector<8x2xf32>
    %cst_28 = arith.constant 3.125000e-02 : f32
    %83 = vector.broadcast %cst_28 : f32 to vector<8x2xf32>
    %84 = arith.mulf %82, %83 : vector<8x2xf32>
    %85 = vector.extract_strided_slice %81 {offsets = [8, 0], sizes = [8, 2], strides = [1, 1]} : vector<16x2xf32> to vector<8x2xf32>
    %cst_29 = arith.constant 3.125000e-02 : f32
    %86 = vector.broadcast %cst_29 : f32 to vector<8x2xf32>
    %87 = arith.mulf %85, %86 : vector<8x2xf32>
    %88 = arith.mulf %84, %84 : vector<8x2xf32>
    %89 = arith.subf %87, %88 : vector<8x2xf32>
    %cst_30 = arith.constant 9.99999974E-6 : f32
    %90 = vector.broadcast %cst_30 : f32 to vector<8x2xf32>
    %91 = arith.addf %89, %90 : vector<8x2xf32>
    %92 = math.rsqrt %91 : vector<8x2xf32>
    %93 = tpu.concatenate %84, %92 in 0 : vector<8x2xf32>, vector<8x2xf32> -> vector<16x2xf32>
    %cst_31 = arith.constant dense<0.000000e+00> : vector<16x32xf32>
    %94 = tpu.matmul %93, %4, %cst_31 {dimension_numbers = #tpu.dot_dimension_numbers<[1], [0], [0], [1], [0, 0, 1, 1], [], []>} : vector<16x2xf32>, vector<2x32xf32>, vector<16x32xf32> -> vector<16x32xf32>
    %cst_32 = arith.constant dense<0.000000e+00> : vector<32x32xf32>
    %95 = tpu.matmul %2, %94, %cst_32 {dimension_numbers = #tpu.dot_dimension_numbers<[1], [0], [0], [1], [0, 0, 1, 1], [], []>} : vector<32x16xf32>, vector<16x32xf32>, vector<32x32xf32> -> vector<32x32xf32>
    %96 = vector.extract_strided_slice %95 {offsets = [0, 0], sizes = [16, 32], strides = [1, 1]} : vector<32x32xf32> to vector<16x32xf32>
    %97 = vector.extract_strided_slice %95 {offsets = [16, 0], sizes = [16, 32], strides = [1, 1]} : vector<32x32xf32> to vector<16x32xf32>
    %98 = arith.subf %77, %96 : vector<16x32xf32>
    %99 = vector.broadcast %9 : vector<16x1xf32> to vector<16x32xf32>
    %100 = arith.mulf %97, %99 : vector<16x32xf32>
    %101 = arith.mulf %98, %100 : vector<16x32xf32>
    %102 = vector.broadcast %10 : vector<16x1xf32> to vector<16x32xf32>
    %103 = arith.addf %101, %102 : vector<16x32xf32>
    %104 = arith.negf %103 : vector<16x32xf32>
    %105 = math.exp %104 : vector<16x32xf32>
    %cst_33 = arith.constant 1.000000e+00 : f32
    %106 = vector.broadcast %cst_33 : f32 to vector<16x32xf32>
    %107 = arith.addf %106, %105 : vector<16x32xf32>
    %108 = arith.divf %106, %107 : vector<16x32xf32>
    %109 = arith.mulf %103, %108 : vector<16x32xf32>
    %c1_i32_34 = arith.constant 1 : i32
    %110 = tpu.dynamic_rotate %109 by %c1_i32_34 dim 1 : vector<16x32xf32>, i32 -> vector<16x32xf32>
    %111 = arith.mulf %32, %110 : vector<16x32xf32>
    %c31_i32_35 = arith.constant 31 : i32
    %112 = tpu.dynamic_rotate %109 by %c31_i32_35 dim 1 : vector<16x32xf32>, i32 -> vector<16x32xf32>
    %113 = arith.mulf %36, %112 : vector<16x32xf32>
    %114 = tpu.concatenate %111, %109, %113 in 0 : vector<16x32xf32>, vector<16x32xf32>, vector<16x32xf32> -> vector<48x32xf32>
    %c0_36 = arith.constant 0 : index
    %c0_37 = arith.constant 0 : index
    %115 = vector.load %arg8[%c0_36, %c0_37] : memref<16x48xf32, #tpu.memory_space<vmem>>, vector<16x48xf32>
    %cst_38 = arith.constant dense<0.000000e+00> : vector<16x32xf32>
    %116 = tpu.matmul %115, %114, %cst_38 {dimension_numbers = #tpu.dot_dimension_numbers<[1], [0], [0], [1], [0, 0, 1, 1], [], []>} : vector<16x48xf32>, vector<48x32xf32>, vector<16x32xf32> -> vector<16x32xf32>
    %117 = vector.broadcast %11 : vector<16x1xf32> to vector<16x32xf32>
    %118 = arith.addf %116, %117 : vector<16x32xf32>
    %119 = arith.addf %0, %118 : vector<16x32xf32>
    %c0_39 = arith.constant 0 : index
    %c0_40 = arith.constant 0 : index
    %120 = vector.load %arg9[%c0_39, %c0_40] : memref<16x32xf32, #tpu.memory_space<vmem>>, vector<16x32xf32>
    tpu.vector_store %arg9[%c0_39, %c0_40], %119 {strides = array<i32>} : memref<16x32xf32, #tpu.memory_space<vmem>>, vector<16x32xf32>,
    return
  }
  func.func @transform_0(%arg0: i32) -> (i32, i32) {
    %c0_i32 = arith.constant 0 : i32
    %c0_i32_0 = arith.constant 0 : i32
    return %c0_i32, %arg0 : i32, i32
  }
  func.func @transform_1(%arg0: i32) -> (i32, i32) {
    %c0_i32 = arith.constant 0 : i32
    %c0_i32_0 = arith.constant 0 : i32
    %c0_i32_1 = arith.constant 0 : i32
    return %c0_i32, %c0_i32_0 : i32, i32
  }
  func.func @transform_2(%arg0: i32) -> (i32, i32) {
    %c0_i32 = arith.constant 0 : i32
    %c0_i32_0 = arith.constant 0 : i32
    %c0_i32_1 = arith.constant 0 : i32
    return %c0_i32, %c0_i32_0 : i32, i32
  }
  func.func @transform_3(%arg0: i32) -> (i32, i32) {
    %c0_i32 = arith.constant 0 : i32
    %c0_i32_0 = arith.constant 0 : i32
    %c0_i32_1 = arith.constant 0 : i32
    return %c0_i32, %c0_i32_0 : i32, i32
  }
  func.func @transform_4(%arg0: i32) -> (i32, i32) {
    %c0_i32 = arith.constant 0 : i32
    %c0_i32_0 = arith.constant 0 : i32
    %c0_i32_1 = arith.constant 0 : i32
    return %c0_i32, %c0_i32_0 : i32, i32
  }
  func.func @transform_5(%arg0: i32) -> (i32, i32) {
    %c0_i32 = arith.constant 0 : i32
    %c0_i32_0 = arith.constant 0 : i32
    %c0_i32_1 = arith.constant 0 : i32
    return %c0_i32, %c0_i32_0 : i32, i32
  }
  func.func @transform_6(%arg0: i32) -> (i32, i32) {
    %c0_i32 = arith.constant 0 : i32
    %c0_i32_0 = arith.constant 0 : i32
    %c0_i32_1 = arith.constant 0 : i32
    return %c0_i32, %c0_i32_0 : i32, i32
  }
  func.func @transform_7(%arg0: i32) -> (i32, i32) {
    %c0_i32 = arith.constant 0 : i32
    %c0_i32_0 = arith.constant 0 : i32
    %c0_i32_1 = arith.constant 0 : i32
    return %c0_i32, %c0_i32_0 : i32, i32
  }
  func.func @transform_8(%arg0: i32) -> (i32, i32) {
    %c0_i32 = arith.constant 0 : i32
    %c0_i32_0 = arith.constant 0 : i32
    return %c0_i32, %arg0 : i32, i32
  }
}

</mosaic_0001>

<llo_original>
// kernel: tpu_custom_call.1
$region0: #{tpu_custom_call.1}
  #allocation0 [shape = 'u32[]', space=smem, size = 0x4, offset = 0x4, fixed_abs, tag = 'smem constant byte address 0x4 - core index']
  #allocation1 [shape = 'u32[144,128]{1,0:T(1,128)}', space=vmem, size = 0x12000, scoped, tag = 'internal scratch']
  %s0 = inlined_call_operand.vmem [shape: f32[16,32], index: 0, kind: input, shape index: {}]
  %s1 = inlined_call_operand.vmem [shape: f32[16,32], index: 1, kind: input, shape index: {}]
  %s2 = inlined_call_operand.vmem [shape: f32[32,16], index: 2, kind: input, shape index: {}]
  %s3 = inlined_call_operand.vmem [shape: f32[32,2], index: 3, kind: input, shape index: {}]
  %s4 = inlined_call_operand.vmem [shape: f32[2,32], index: 4, kind: input, shape index: {}]
  %s5 = inlined_call_operand.vmem [shape: f32[16,8], index: 5, kind: input, shape index: {}]
  %s6 = inlined_call_operand.vmem [shape: f32[16,48], index: 6, kind: input, shape index: {}]
  %s7 = inlined_call_operand.vmem [shape: f32[16,48], index: 7, kind: input, shape index: {}]
  %s8 = inlined_call_operand.hbm [shape: f32[16,32], index: 8, kind: output, shape index: {}]
  %s9 = sld [smem:[#allocation0]]
  $region42: #{tpu_custom_call.1} parent=0
    _
  %s11 = ssub.s32 1, %s9
  %s12 = scalar_select 0, %s11, %s9
  $region1: #{tpu_custom_call.1} parent=0
    #allocation2 [shape = 'u8[8192]{0}', space=vmem, size = 0x2000, scoped, tag = 'output window, operand 0, single buffered']
    #allocation3 [shape = 's32[1]{0}', space=sflag, size = 0x4, scoped, tag = 'scoped memory for tpu_custom_call.1']
    %13 = vsyncpa [#allocation3], 0
    // Predicated region
    $region2: #{tpu_custom_call.1} parent=1 // pred_check
      _
    $region3: #{tpu_custom_call.1} parent=1 // pred_check_branch
      %15 = sbr.rel (0) target = $region5
    $region4: #{tpu_custom_call.1} parent=1 // pred_region
      _
    $region5: #{tpu_custom_call.1} parent=1 // pred_fallthru
      _
    // Predicated region
    $region6: #{tpu_custom_call.1} parent=1 // pred_check
      _
    $region7: #{tpu_custom_call.1} parent=1 // pred_check_branch
      %17 = sbr.rel (0) target = $region9
    $region8: #{tpu_custom_call.1} parent=1 // pred_region
      _
    $region9: #{tpu_custom_call.1} parent=1 // pred_fallthru
      _
    // Predicated region
    $region10: #{tpu_custom_call.1} parent=1 // pred_check
      _
    $region11: #{tpu_custom_call.1} parent=1 // pred_check_branch
      %19 = sbr.rel (0) target = $region13
    $region12: #{tpu_custom_call.1} parent=1 // pred_region
      _
    $region13: #{tpu_custom_call.1} parent=1 // pred_fallthru
      _
    // Predicated region
    $region14: #{tpu_custom_call.1} parent=1 // pred_check
      _
    $region15: #{tpu_custom_call.1} parent=1 // pred_check_branch
      %21 = sbr.rel (0) target = $region17
    $region16: #{tpu_custom_call.1} parent=1 // pred_region
      _
    $region17: #{tpu_custom_call.1} parent=1 // pred_fallthru
      _
    // Predicated region
    $region18: #{tpu_custom_call.1} parent=1 // pred_check
      _
    $region19: #{tpu_custom_call.1} parent=1 // pred_check_branch
      %23 = sbr.rel (0) target = $region21
    $region20: #{tpu_custom_call.1} parent=1 // pred_region
      _
    $region21: #{tpu_custom_call.1} parent=1 // pred_fallthru
      _
    // Predicated region
    $region22: #{tpu_custom_call.1} parent=1 // pred_check
      _
    $region23: #{tpu_custom_call.1} parent=1 // pred_check_branch
      %25 = sbr.rel (0) target = $region25
    $region24: #{tpu_custom_call.1} parent=1 // pred_region
      _
    $region25: #{tpu_custom_call.1} parent=1 // pred_fallthru
      _
    // Predicated region
    $region26: #{tpu_custom_call.1} parent=1 // pred_check
      _
    $region27: #{tpu_custom_call.1} parent=1 // pred_check_branch
      %27 = sbr.rel (0) target = $region29
    $region28: #{tpu_custom_call.1} parent=1 // pred_region
      _
    $region29: #{tpu_custom_call.1} parent=1 // pred_fallthru
      _
    // Predicated region
    $region30: #{tpu_custom_call.1} parent=1 // pred_check
      _
    $region31: #{tpu_custom_call.1} parent=1 // pred_check_branch
      %29 = sbr.rel (0) target = $region33
    $region32: #{tpu_custom_call.1} parent=1 // pred_region
      _
    $region33: #{tpu_custom_call.1} parent=1 // pred_fallthru
      _
    %v30 = vld [vmem:[%s0] sm:$0xff]
    %v31 = vld [vmem:[%s0 + $0x8] sm:$0xff]
    %v32 = vld [vmem:[%s1] sm:$0xff]
    %v33 = vld [vmem:[%s1 + $0x8] sm:$0xff]
    %v34 = vld [vmem:[%s2] sm:$0xff]
    %v35 = vld [vmem:[%s2 + $0x8] sm:$0xff]
    %v36 = vld [vmem:[%s2 + $0x10] sm:$0xff]
    %v37 = vld [vmem:[%s2 + $0x18] sm:$0xff]
    %v38 = vld [vmem:[%s3] sm:$0xff]
    %v39 = vld [vmem:[%s3 + $0x8] sm:$0xff]
    %v40 = vld [vmem:[%s3 + $0x10] sm:$0xff]
    %v41 = vld [vmem:[%s3 + $0x18] sm:$0xff]
    %v42 = vld [vmem:[%s4] sm:$0x3]
    %v43 = vld [vmem:[%s5] sm:$0xff]
    %v44 = vld [vmem:[%s5 + $0x8] sm:$0xff]
    %v45 = vlaneseq
    %v46 = vand.u32 %v45, 127
    %vm47 = vcmp.lt.s32.totalorder %v46, 0
    %v48 = vsub.s32 0, %v46
    %v49 = vsel %vm47, %v48, %v46
    %v50 = vshrl.u32 %v49, 4
    %v51 = vand.u32 %v49, 15
    %v52 = vsub.s32 0, %v51
    %v53 = vsel %vm47, %v52, %v51
    %vm54 = vcmp.ne.s32.totalorder %v53, 0
    %vm55 = vcmp.lt.s32.totalorder %v53, 0
    %vm56 = vmand %vm55, %vm54
    %v57 = vadd.s32 %v53, 16
    %v58 = vsel %vm56, %v57, %v53
    %vm59 = vcmp.ge.s32.totalorder %v58, 1
    %v60 = vsel %vm59, 1, 0
    %v61 = vcvt.s32.f32 %v60
    %vm62 = vcmp.le.s32.totalorder %v58, 14
    %v63 = vsel %vm62, 1, 0
    %v64 = vcvt.s32.f32 %v63
    %v65 = vmul.f32 %v30, %v30
    %v66 = vmul.f32 %v31, %v31
    %vm67 = vcmask 261120
    %v69 = vsel %vm67, %v32, 0
    %v72 = vsel %vm67, %v33, 0
    %74 = vmatprep.subr.mxu0 0.0
    %75 = vmatpush1.msra.mxu0 %v30
    %76 = vmatprep.subr.mxu0 0.0
    %77 = vmatpush1.msra.mxu0 %v31
    %78 = vmatprep.subr.mxu0 0.0
    %79 = vmatpush1.msra.mxu0 %v65
    %80 = vmatprep.subr.mxu0 0.0
    %81 = vmatpush1.msra.mxu0 %v66
    %82 = vmatprep.subr.mxu0 0.0
    %83 = vmatpush1.msra.mxu0 0.0
    %84 = vmatprep.subr.mxu0 0.0
    %85 = vmatpush1.msra.mxu0 0.0
    %86 = vmatprep.subr.mxu0 0.0
    %87 = vmatpush1.msra.mxu0 0.0
    %88 = vmatprep.subr.mxu0 0.0
    %89 = vmatpush1.msra.mxu0 0.0
    %90 = vmatprep.subr.mxu0 0.0
    %91 = vmatpush1.msra.mxu0 0.0
    %92 = vmatprep.subr.mxu0 0.0
    %93 = vmatpush1.msra.mxu0 0.0
    %94 = vmatprep.subr.mxu0 0.0
    %95 = vmatpush1.msra.mxu0 0.0
    %96 = vmatprep.subr.mxu0 0.0
    %97 = vmatpush1.msra.mxu0 0.0
    %98 = vmatprep.subr.mxu0 0.0
    %99 = vmatpush1.msra.mxu0 0.0
    %100 = vmatprep.subr.mxu0 0.0
    %101 = vmatpush1.msra.mxu0 0.0
    %102 = vmatprep.subr.mxu0 0.0
    %103 = vmatpush1.msra.mxu0 0.0
    %104 = vmatprep.subr.mxu0 0.0
    %105 = vmatpush1.msra.mxu0 0.0
    %106 = vmatprep.subr.mxu0 0.0
    %107 = vmatpush1.msra.mxu0 0.0
    %108 = vmatprep.subr.mxu0 0.0
    %109 = vmatpush1.msra.mxu0 0.0
    %110 = vmatprep.subr.mxu0 0.0
    %111 = vmatpush1.msra.mxu0 0.0
    %112 = vmatprep.subr.mxu0 0.0
    %113 = vmatpush1.msra.mxu0 0.0
    %114 = vmatprep.subr.mxu0 0.0
    %115 = vmatpush1.msra.mxu0 0.0
    %116 = vmatprep.subr.mxu0 0.0
    %117 = vmatpush1.msra.mxu0 0.0
    %118 = vmatprep.subr.mxu0 0.0
    %119 = vmatpush1.msra.mxu0 0.0
    %120 = vmatprep.subr.mxu0 0.0
    %121 = vmatpush1.msra.mxu0 0.0
    %122 = vmatprep.subr.mxu0 0.0
    %123 = vmatpush1.msra.mxu0 0.0
    %124 = vmatprep.subr.mxu0 0.0
    %125 = vmatpush1.msra.mxu0 0.0
    %126 = vmatprep.subr.mxu0 0.0
    %127 = vmatpush1.msra.mxu0 0.0
    %128 = vmatprep.subr.mxu0 0.0
    %129 = vmatpush1.msra.mxu0 0.0
    %130 = vmatprep.subr.mxu0 0.0
    %131 = vmatpush1.msra.mxu0 0.0
    %132 = vmatprep.subr.mxu0 0.0
    %133 = vmatpush1.msra.mxu0 0.0
    %134 = vmatprep.subr.mxu0 0.0
    %135 = vmatpush1.msra.mxu0 0.0
    %136 = vmatprep.subr.mxu0 0.0
    %137 = vmatpush1.msra.mxu0 0.0
    %138 = vmatprep.mubr.f32.mxu0 0.0
    %139 = vmatmul.mubr.f32.gmra.mrb[0].mxu0 %v69
    %v140 = vpop.f32.mrb[0].mxu0
    %v141 = vadd.f32 0.0, %v140
    %v142 = vpop.f32.mrb[0].mxu0
    %143 = vmatprep.mubr.f32.mxu0 0.0
    %144 = vmatmul.mubr.f32.gmra.mrb[0].mxu0 %v72
    %v145 = vpop.f32.mrb[0].mxu0
    %v146 = vadd.f32 0.0, %v145
    %v147 = vpop.f32.mrb[0].mxu0
    %148 = vdwg.mxu0
    %v150 = vsel %vm67, %v141, 0
    %v153 = vsel %vm67, %v146, 0
    %155 = vmatprep.subr.mxu0 0.0
    %156 = vmatpush1.msra.mxu0 %v38
    %157 = vmatprep.subr.mxu0 0.0
    %158 = vmatpush1.msra.mxu0 %v39
    %159 = vmatprep.subr.mxu0 0.0
    %160 = vmatpush1.msra.mxu0 %v40
    %161 = vmatprep.subr.mxu0 0.0
    %162 = vmatpush1.msra.mxu0 %v41
    %163 = vmatprep.subr.mxu0 0.0
    %164 = vmatpush1.msra.mxu0 0.0
    %165 = vmatprep.subr.mxu0 0.0
    %166 = vmatpush1.msra.mxu0 0.0
    %167 = vmatprep.subr.mxu0 0.0
    %168 = vmatpush1.msra.mxu0 0.0
    %169 = vmatprep.subr.mxu0 0.0
    %170 = vmatpush1.msra.mxu0 0.0
    %171 = vmatprep.subr.mxu0 0.0
    %172 = vmatpush1.msra.mxu0 0.0
    %173 = vmatprep.subr.mxu0 0.0
    %174 = vmatpush1.msra.mxu0 0.0
    %175 = vmatprep.subr.mxu0 0.0
    %176 = vmatpush1.msra.mxu0 0.0
    %177 = vmatprep.subr.mxu0 0.0
    %178 = vmatpush1.msra.mxu0 0.0
    %179 = vmatprep.subr.mxu0 0.0
    %180 = vmatpush1.msra.mxu0 0.0
    %181 = vmatprep.subr.mxu0 0.0
    %182 = vmatpush1.msra.mxu0 0.0
    %183 = vmatprep.subr.mxu0 0.0
    %184 = vmatpush1.msra.mxu0 0.0
    %185 = vmatprep.subr.mxu0 0.0
    %186 = vmatpush1.msra.mxu0 0.0
    %187 = vmatprep.subr.mxu0 0.0
    %188 = vmatpush1.msra.mxu0 0.0
    %189 = vmatprep.subr.mxu0 0.0
    %190 = vmatpush1.msra.mxu0 0.0
    %191 = vmatprep.subr.mxu0 0.0
    %192 = vmatpush1.msra.mxu0 0.0
    %193 = vmatprep.subr.mxu0 0.0
    %194 = vmatpush1.msra.mxu0 0.0
    %195 = vmatprep.subr.mxu0 0.0
    %196 = vmatpush1.msra.mxu0 0.0
    %197 = vmatprep.subr.mxu0 0.0
    %198 = vmatpush1.msra.mxu0 0.0
    %199 = vmatprep.subr.mxu0 0.0
    %200 = vmatpush1.msra.mxu0 0.0
    %201 = vmatprep.subr.mxu0 0.0
    %202 = vmatpush1.msra.mxu0 0.0
    %203 = vmatprep.subr.mxu0 0.0
    %204 = vmatpush1.msra.mxu0 0.0
    %205 = vmatprep.subr.mxu0 0.0
    %206 = vmatpush1.msra.mxu0 0.0
    %207 = vmatprep.subr.mxu0 0.0
    %208 = vmatpush1.msra.mxu0 0.0
    %209 = vmatprep.subr.mxu0 0.0
    %210 = vmatpush1.msra.mxu0 0.0
    %211 = vmatprep.subr.mxu0 0.0
    %212 = vmatpush1.msra.mxu0 0.0
    %213 = vmatprep.subr.mxu0 0.0
    %214 = vmatpush1.msra.mxu0 0.0
    %215 = vmatprep.subr.mxu0 0.0
    %216 = vmatpush1.msra.mxu0 0.0
    %217 = vmatprep.subr.mxu0 0.0
    %218 = vmatpush1.msra.mxu0 0.0
    %219 = vmatprep.mubr.f32.mxu0 0.0
    %220 = vmatmul.mubr.f32.gmra.mrb[0].mxu0 %v150
    %v221 = vpop.f32.mrb[0].mxu0
    %v222 = vadd.f32 0.0, %v221
    %v223 = vpop.f32.mrb[0].mxu0
    %224 = vmatprep.mubr.f32.mxu0 0.0
    %225 = vmatmul.mubr.f32.gmra.mrb[0].mxu0 %v153
    %v226 = vpop.f32.mrb[0].mxu0
    %v227 = vadd.f32 0.0, %v226
    %v228 = vpop.f32.mrb[0].mxu0
    %229 = vdwg.mxu0
    %v230 = vmul.f32 %v222, 0.03125
    %v231 = vmul.f32 %v227, 0.03125
    %v232 = vmul.f32 %v230, %v230
    %v233 = vsub.f32 %v231, %v232
    %v234 = vadd.f32 %v233, 1e-05
    %v235 = vrsqrt.pop %v234
    %vm236 = vcmask 15360
    %v238 = vsel %vm236, %v230, 0
    %v241 = vsel %vm236, %v235, 0
    %vm243 = vcmask 1041408
    %v245 = vsel %vm243, %v42, 0
    %247 = vmatprep.subr.mxu0 0.0
    %248 = vmatpush1.msra.mxu0 %v245
    %249 = vmatprep.subr.mxu0 0.0
    %250 = vmatpush1.msra.mxu0 0.0
    %251 = vmatprep.subr.mxu0 0.0
    %252 = vmatpush1.msra.mxu0 0.0
    %253 = vmatprep.subr.mxu0 0.0
    %254 = vmatpush1.msra.mxu0 0.0
    %255 = vmatprep.subr.mxu0 0.0
    %256 = vmatpush1.msra.mxu0 0.0
    %257 = vmatprep.subr.mxu0 0.0
    %258 = vmatpush1.msra.mxu0 0.0
    %259 = vmatprep.subr.mxu0 0.0
    %260 = vmatpush1.msra.mxu0 0.0
    %261 = vmatprep.subr.mxu0 0.0
    %262 = vmatpush1.msra.mxu0 0.0
    %263 = vmatprep.subr.mxu0 0.0
    %264 = vmatpush1.msra.mxu0 0.0
    %265 = vmatprep.subr.mxu0 0.0
    %266 = vmatpush1.msra.mxu0 0.0
    %267 = vmatprep.subr.mxu0 0.0
    %268 = vmatpush1.msra.mxu0 0.0
    %269 = vmatprep.subr.mxu0 0.0
    %270 = vmatpush1.msra.mxu0 0.0
    %271 = vmatprep.subr.mxu0 0.0
    %272 = vmatpush1.msra.mxu0 0.0
    %273 = vmatprep.subr.mxu0 0.0
    %274 = vmatpush1.msra.mxu0 0.0
    %275 = vmatprep.subr.mxu0 0.0
    %276 = vmatpush1.msra.mxu0 0.0
    %277 = vmatprep.subr.mxu0 0.0
    %278 = vmatpush1.msra.mxu0 0.0
    %279 = vmatprep.subr.mxu0 0.0
    %280 = vmatpush1.msra.mxu0 0.0
    %281 = vmatprep.subr.mxu0 0.0
    %282 = vmatpush1.msra.mxu0 0.0
    %283 = vmatprep.subr.mxu0 0.0
    %284 = vmatpush1.msra.mxu0 0.0
    %285 = vmatprep.subr.mxu0 0.0
    %286 = vmatpush1.msra.mxu0 0.0
    %287 = vmatprep.subr.mxu0 0.0
    %288 = vmatpush1.msra.mxu0 0.0
    %289 = vmatprep.subr.mxu0 0.0
    %290 = vmatpush1.msra.mxu0 0.0
    %291 = vmatprep.subr.mxu0 0.0
    %292 = vmatpush1.msra.mxu0 0.0
    %293 = vmatprep.subr.mxu0 0.0
    %294 = vmatpush1.msra.mxu0 0.0
    %295 = vmatprep.subr.mxu0 0.0
    %296 = vmatpush1.msra.mxu0 0.0
    %297 = vmatprep.subr.mxu0 0.0
    %298 = vmatpush1.msra.mxu0 0.0
    %299 = vmatprep.subr.mxu0 0.0
    %300 = vmatpush1.msra.mxu0 0.0
    %301 = vmatprep.subr.mxu0 0.0
    %302 = vmatpush1.msra.mxu0 0.0
    %303 = vmatprep.subr.mxu0 0.0
    %304 = vmatpush1.msra.mxu0 0.0
    %305 = vmatprep.subr.mxu0 0.0
    %306 = vmatpush1.msra.mxu0 0.0
    %307 = vmatprep.subr.mxu0 0.0
    %308 = vmatpush1.msra.mxu0 0.0
    %309 = vmatprep.subr.mxu0 0.0
    %310 = vmatpush1.msra.mxu0 0.0
    %311 = vmatprep.mubr.f32.mxu0 0.0
    %312 = vmatmul.mubr.f32.gmra.mrb[0].mxu0 %v238
    %v313 = vpop.f32.mrb[0].mxu0
    %v314 = vadd.f32 0.0, %v313
    %v315 = vpop.f32.mrb[0].mxu0
    %316 = vmatprep.mubr.f32.mxu0 0.0
    %317 = vmatmul.mubr.f32.gmra.mrb[0].mxu0 %v241
    %v318 = vpop.f32.mrb[0].mxu0
    %v319 = vadd.f32 0.0, %v318
    %v320 = vpop.f32.mrb[0].mxu0
    %321 = vdwg.mxu0
    %vm322 = vcmask 130048
    %v324 = vsel %vm322, %v34, 0
    %v327 = vsel %vm322, %v35, 0
    %v330 = vsel %vm322, %v36, 0
    %v333 = vsel %vm322, %v37, 0
    %335 = vmatprep.subr.mxu0 0.0
    %336 = vmatpush1.msra.mxu0 %v314
    %337 = vmatprep.subr.mxu0 0.0
    %338 = vmatpush1.msra.mxu0 %v319
    %339 = vmatprep.subr.mxu0 0.0
    %340 = vmatpush1.msra.mxu0 0.0
    %341 = vmatprep.subr.mxu0 0.0
    %342 = vmatpush1.msra.mxu0 0.0
    %343 = vmatprep.subr.mxu0 0.0
    %344 = vmatpush1.msra.mxu0 0.0
    %345 = vmatprep.subr.mxu0 0.0
    %346 = vmatpush1.msra.mxu0 0.0
    %347 = vmatprep.subr.mxu0 0.0
    %348 = vmatpush1.msra.mxu0 0.0
    %349 = vmatprep.subr.mxu0 0.0
    %350 = vmatpush1.msra.mxu0 0.0
    %351 = vmatprep.subr.mxu0 0.0
    %352 = vmatpush1.msra.mxu0 0.0
    %353 = vmatprep.subr.mxu0 0.0
    %354 = vmatpush1.msra.mxu0 0.0
    %355 = vmatprep.subr.mxu0 0.0
    %356 = vmatpush1.msra.mxu0 0.0
    %357 = vmatprep.subr.mxu0 0.0
    %358 = vmatpush1.msra.mxu0 0.0
    %359 = vmatprep.subr.mxu0 0.0
    %360 = vmatpush1.msra.mxu0 0.0
    %361 = vmatprep.subr.mxu0 0.0
    %362 = vmatpush1.msra.mxu0 0.0
    %363 = vmatprep.subr.mxu0 0.0
    %364 = vmatpush1.msra.mxu0 0.0
    %365 = vmatprep.subr.mxu0 0.0
    %366 = vmatpush1.msra.mxu0 0.0
    %367 = vmatprep.subr.mxu0 0.0
    %368 = vmatpush1.msra.mxu0 0.0
    %369 = vmatprep.subr.mxu0 0.0
    %370 = vmatpush1.msra.mxu0 0.0
    %371 = vmatprep.subr.mxu0 0.0
    %372 = vmatpush1.msra.mxu0 0.0
    %373 = vmatprep.subr.mxu0 0.0
    %374 = vmatpush1.msra.mxu0 0.0
    %375 = vmatprep.subr.mxu0 0.0
    %376 = vmatpush1.msra.mxu0 0.0
    %377 = vmatprep.subr.mxu0 0.0
    %378 = vmatpush1.msra.mxu0 0.0
    %379 = vmatprep.subr.mxu0 0.0
    %380 = vmatpush1.msra.mxu0 0.0
    %381 = vmatprep.subr.mxu0 0.0
    %382 = vmatpush1.msra.mxu0 0.0
    %383 = vmatprep.subr.mxu0 0.0
    %384 = vmatpush1.msra.mxu0 0.0
    %385 = vmatprep.subr.mxu0 0.0
    %386 = vmatpush1.msra.mxu0 0.0
    %387 = vmatprep.subr.mxu0 0.0
    %388 = vmatpush1.msra.mxu0 0.0
    %389 = vmatprep.subr.mxu0 0.0
    %390 = vmatpush1.msra.mxu0 0.0
    %391 = vmatprep.subr.mxu0 0.0
    %392 = vmatpush1.msra.mxu0 0.0
    %393 = vmatprep.subr.mxu0 0.0
    %394 = vmatpush1.msra.mxu0 0.0
    %395 = vmatprep.subr.mxu0 0.0
    %396 = vmatpush1.msra.mxu0 0.0
    %397 = vmatprep.subr.mxu0 0.0
    %398 = vmatpush1.msra.mxu0 0.0
    %399 = vmatprep.mubr.f32.mxu0 0.0
    %400 = vmatmul.mubr.f32.gmra.mrb[0].mxu0 %v324
    %v401 = vpop.f32.mrb[0].mxu0
    %v402 = vadd.f32 0.0, %v401
    %v403 = vpop.f32.mrb[0].mxu0
    %404 = vmatprep.mubr.f32.mxu0 0.0
    %405 = vmatmul.mubr.f32.gmra.mrb[0].mxu0 %v327
    %v406 = vpop.f32.mrb[0].mxu0
    %v407 = vadd.f32 0.0, %v406
    %v408 = vpop.f32.mrb[0].mxu0
    %409 = vmatprep.mubr.f32.mxu0 0.0
    %410 = vmatmul.mubr.f32.gmra.mrb[0].mxu0 %v330
    %v411 = vpop.f32.mrb[0].mxu0
    %v412 = vadd.f32 0.0, %v411
    %v413 = vpop.f32.mrb[0].mxu0
    %414 = vmatprep.mubr.f32.mxu0 0.0
    %415 = vmatmul.mubr.f32.gmra.mrb[0].mxu0 %v333
    %v416 = vpop.f32.mrb[0].mxu0
    %v417 = vadd.f32 0.0, %v416
    %v418 = vpop.f32.mrb[0].mxu0
    %419 = vdwg.mxu0
    %v420 = vsub.f32 %v30, %v402
    %v421 = vsub.f32 %v31, %v407
    %423 = vset.pattern.permute.xlu0 0
    %424 = vperm.xlu0 %423, %v43
    %v425 = vpop.permute.xlu0 %424
    %428 = vset.pattern.permute.xlu0 0
    %429 = vperm.xlu0 %428, %v44
    %v430 = vpop.permute.xlu0 %429
    %v432 = vmul.f32 %v412, %v425
    %v433 = vmul.f32 %v417, %v430
    %v434 = vmul.f32 %v420, %v432
    %v435 = vmul.f32 %v421, %v433
    %436 = vset.pattern.permute.xlu0 1
    %437 = vperm.xlu0 %436, %v43
    %v438 = vpop.permute.xlu0 %437
    %440 = vset.pattern.permute.xlu0 1
    %441 = vperm.xlu0 %440, %v44
    %v442 = vpop.permute.xlu0 %441
    %v444 = vadd.f32 %v434, %v438
    %v445 = vadd.f32 %v435, %v442
    %v446 = vxor.u32 %v444, 2147483648
    %v447 = vxor.u32 %v445, 2147483648
    %v448 = vmul.f32 %v446, 1.442695
    %v449 = vpow.pop %v448
    %v450 = vmul.f32 %v447, 1.442695
    %v451 = vpow.pop %v450
    %v452 = vadd.f32 %v449, 1.0
    %v453 = vadd.f32 %v451, 1.0
    %v454 = vrcp.pop %v452
    %v455 = vmul.f32 1.0, %v454
    %v456 = vrcp.pop %v453
    %v457 = vmul.f32 1.0, %v456
    %v458 = vmul.f32 %v444, %v455
    %v459 = vmul.f32 %v445, %v457
    %vm460 = vcmask 1047808
    %461 = vrot.lane.b32.xlu0 %v458, 32
    %v462 = vpop.permute.xlu0 %461
    %v463 = vsel %vm460, %v462, %v458
    %464 = vrot.lane.b32.xlu0 %v459, 32
    %v465 = vpop.permute.xlu0 %464
    %v466 = vsel %vm460, %v465, %v459
    %467 = vrot.lane.b32.xlu0 %v463, 32
    %v468 = vpop.permute.xlu0 %467
    %469 = vrot.lane.b32.xlu0 %v466, 32
    %v470 = vpop.permute.xlu0 %469
    %v471 = vsel %vm460, %v468, %v458
    %v472 = vsel %vm460, %v470, %v459
    %475 = vrot.lane.b32.xlu0 %v471, 97
    %v476 = vpop.permute.xlu0 %475
    %477 = vrot.lane.b32.xlu0 %v472, 97
    %v478 = vpop.permute.xlu0 %477
    %v481 = vmul.f32 %v61, %v476
    %v482 = vmul.f32 %v61, %v478
    %483 = vrot.lane.b32.xlu0 %v471, 127
    %v484 = vpop.permute.xlu0 %483
    %485 = vrot.lane.b32.xlu0 %v472, 127
    %v486 = vpop.permute.xlu0 %485
    %v489 = vmul.f32 %v64, %v484
    %v490 = vmul.f32 %v64, %v486
    %v491 = vld [vmem:[%s6] sm:$0xff]
    %v492 = vld [vmem:[%s6 + $0x8] sm:$0xff]
    %493 = vset.pattern.permute.xlu0 2
    %494 = vperm.xlu0 %493, %v43
    %v495 = vpop.permute.xlu0 %494
    %497 = vset.pattern.permute.xlu0 2
    %498 = vperm.xlu0 %497, %v44
    %v499 = vpop.permute.xlu0 %498
    %vm501 = vcmask 392192
    %v503 = vsel %vm501, %v491, 0
    %v506 = vsel %vm501, %v492, 0
    %508 = vmatprep.subr.mxu0 0.0
    %509 = vmatpush1.msra.mxu0 %v481
    %510 = vmatprep.subr.mxu0 0.0
    %511 = vmatpush1.msra.mxu0 %v482
    %512 = vmatprep.subr.mxu0 0.0
    %513 = vmatpush1.msra.mxu0 %v458
    %514 = vmatprep.subr.mxu0 0.0
    %515 = vmatpush1.msra.mxu0 %v459
    %516 = vmatprep.subr.mxu0 0.0
    %517 = vmatpush1.msra.mxu0 %v489
    %518 = vmatprep.subr.mxu0 0.0
    %519 = vmatpush1.msra.mxu0 %v490
    %520 = vmatprep.subr.mxu0 0.0
    %521 = vmatpush1.msra.mxu0 0.0
    %522 = vmatprep.subr.mxu0 0.0
    %523 = vmatpush1.msra.mxu0 0.0
    %524 = vmatprep.subr.mxu0 0.0
    %525 = vmatpush1.msra.mxu0 0.0
    %526 = vmatprep.subr.mxu0 0.0
    %527 = vmatpush1.msra.mxu0 0.0
    %528 = vmatprep.subr.mxu0 0.0
    %529 = vmatpush1.msra.mxu0 0.0
    %530 = vmatprep.subr.mxu0 0.0
    %531 = vmatpush1.msra.mxu0 0.0
    %532 = vmatprep.subr.mxu0 0.0
    %533 = vmatpush1.msra.mxu0 0.0
    %534 = vmatprep.subr.mxu0 0.0
    %535 = vmatpush1.msra.mxu0 0.0
    %536 = vmatprep.subr.mxu0 0.0
    %537 = vmatpush1.msra.mxu0 0.0
    %538 = vmatprep.subr.mxu0 0.0
    %539 = vmatpush1.msra.mxu0 0.0
    %540 = vmatprep.subr.mxu0 0.0
    %541 = vmatpush1.msra.mxu0 0.0
    %542 = vmatprep.subr.mxu0 0.0
    %543 = vmatpush1.msra.mxu0 0.0
    %544 = vmatprep.subr.mxu0 0.0
    %545 = vmatpush1.msra.mxu0 0.0
    %546 = vmatprep.subr.mxu0 0.0
    %547 = vmatpush1.msra.mxu0 0.0
    %548 = vmatprep.subr.mxu0 0.0
    %549 = vmatpush1.msra.mxu0 0.0
    %550 = vmatprep.subr.mxu0 0.0
    %551 = vmatpush1.msra.mxu0 0.0
    %552 = vmatprep.subr.mxu0 0.0
    %553 = vmatpush1.msra.mxu0 0.0
    %554 = vmatprep.subr.mxu0 0.0
    %555 = vmatpush1.msra.mxu0 0.0
    %556 = vmatprep.subr.mxu0 0.0
    %557 = vmatpush1.msra.mxu0 0.0
    %558 = vmatprep.subr.mxu0 0.0
    %559 = vmatpush1.msra.mxu0 0.0
    %560 = vmatprep.subr.mxu0 0.0
    %561 = vmatpush1.msra.mxu0 0.0
    %562 = vmatprep.subr.mxu0 0.0
    %563 = vmatpush1.msra.mxu0 0.0
    %564 = vmatprep.subr.mxu0 0.0
    %565 = vmatpush1.msra.mxu0 0.0
    %566 = vmatprep.subr.mxu0 0.0
    %567 = vmatpush1.msra.mxu0 0.0
    %568 = vmatprep.subr.mxu0 0.0
    %569 = vmatpush1.msra.mxu0 0.0
    %570 = vmatprep.subr.mxu0 0.0
    %571 = vmatpush1.msra.mxu0 0.0
    %572 = vmatprep.mubr.f32.mxu0 0.0
    %573 = vmatmul.mubr.f32.gmra.mrb[0].mxu0 %v503
    %v574 = vpop.f32.mrb[0].mxu0
    %v575 = vadd.f32 %v495, %v574
    %v576 = vpop.f32.mrb[0].mxu0
    %577 = vmatprep.mubr.f32.mxu0 0.0
    %578 = vmatmul.mubr.f32.gmra.mrb[0].mxu0 %v506
    %v579 = vpop.f32.mrb[0].mxu0
    %v580 = vadd.f32 %v499, %v579
    %v581 = vpop.f32.mrb[0].mxu0
    %582 = vdwg.mxu0
    %v583 = vmul.f32 %v575, %v575
    %v584 = vmul.f32 %v580, %v580
    %585 = vmatprep.subr.mxu0 0.0
    %586 = vmatpush1.msra.mxu0 %v575
    %587 = vmatprep.subr.mxu0 0.0
    %588 = vmatpush1.msra.mxu0 %v580
    %589 = vmatprep.subr.mxu0 0.0
    %590 = vmatpush1.msra.mxu0 %v583
    %591 = vmatprep.subr.mxu0 0.0
    %592 = vmatpush1.msra.mxu0 %v584
    %593 = vmatprep.subr.mxu0 0.0
    %594 = vmatpush1.msra.mxu0 0.0
    %595 = vmatprep.subr.mxu0 0.0
    %596 = vmatpush1.msra.mxu0 0.0
    %597 = vmatprep.subr.mxu0 0.0
    %598 = vmatpush1.msra.mxu0 0.0
    %599 = vmatprep.subr.mxu0 0.0
    %600 = vmatpush1.msra.mxu0 0.0
    %601 = vmatprep.subr.mxu0 0.0
    %602 = vmatpush1.msra.mxu0 0.0
    %603 = vmatprep.subr.mxu0 0.0
    %604 = vmatpush1.msra.mxu0 0.0
    %605 = vmatprep.subr.mxu0 0.0
    %606 = vmatpush1.msra.mxu0 0.0
    %607 = vmatprep.subr.mxu0 0.0
    %608 = vmatpush1.msra.mxu0 0.0
    %609 = vmatprep.subr.mxu0 0.0
    %610 = vmatpush1.msra.mxu0 0.0
    %611 = vmatprep.subr.mxu0 0.0
    %612 = vmatpush1.msra.mxu0 0.0
    %613 = vmatprep.subr.mxu0 0.0
    %614 = vmatpush1.msra.mxu0 0.0
    %615 = vmatprep.subr.mxu0 0.0
    %616 = vmatpush1.msra.mxu0 0.0
    %617 = vmatprep.subr.mxu0 0.0
    %618 = vmatpush1.msra.mxu0 0.0
    %619 = vmatprep.subr.mxu0 0.0
    %620 = vmatpush1.msra.mxu0 0.0
    %621 = vmatprep.subr.mxu0 0.0
    %622 = vmatpush1.msra.mxu0 0.0
    %623 = vmatprep.subr.mxu0 0.0
    %624 = vmatpush1.msra.mxu0 0.0
    %625 = vmatprep.subr.mxu0 0.0
    %626 = vmatpush1.msra.mxu0 0.0
    %627 = vmatprep.subr.mxu0 0.0
    %628 = vmatpush1.msra.mxu0 0.0
    %629 = vmatprep.subr.mxu0 0.0
    %630 = vmatpush1.msra.mxu0 0.0
    %631 = vmatprep.subr.mxu0 0.0
    %632 = vmatpush1.msra.mxu0 0.0
    %633 = vmatprep.subr.mxu0 0.0
    %634 = vmatpush1.msra.mxu0 0.0
    %635 = vmatprep.subr.mxu0 0.0
    %636 = vmatpush1.msra.mxu0 0.0
    %637 = vmatprep.subr.mxu0 0.0
    %638 = vmatpush1.msra.mxu0 0.0
    %639 = vmatprep.subr.mxu0 0.0
    %640 = vmatpush1.msra.mxu0 0.0
    %641 = vmatprep.subr.mxu0 0.0
    %642 = vmatpush1.msra.mxu0 0.0
    %643 = vmatprep.subr.mxu0 0.0
    %644 = vmatpush1.msra.mxu0 0.0
    %645 = vmatprep.subr.mxu0 0.0
    %646 = vmatpush1.msra.mxu0 0.0
    %647 = vmatprep.subr.mxu0 0.0
    %648 = vmatpush1.msra.mxu0 0.0
    %649 = vmatprep.mubr.f32.mxu0 0.0
    %650 = vmatmul.mubr.f32.gmra.mrb[0].mxu0 %v69
    %v651 = vpop.f32.mrb[0].mxu0
    %v652 = vadd.f32 0.0, %v651
    %v653 = vpop.f32.mrb[0].mxu0
    %654 = vmatprep.mubr.f32.mxu0 0.0
    %655 = vmatmul.mubr.f32.gmra.mrb[0].mxu0 %v72
    %v656 = vpop.f32.mrb[0].mxu0
    %v657 = vadd.f32 0.0, %v656
    %v658 = vpop.f32.mrb[0].mxu0
    %659 = vdwg.mxu0
    %v661 = vsel %vm67, %v652, 0
    %v664 = vsel %vm67, %v657, 0
    %666 = vmatprep.subr.mxu0 0.0
    %667 = vmatpush1.msra.mxu0 %v38
    %668 = vmatprep.subr.mxu0 0.0
    %669 = vmatpush1.msra.mxu0 %v39
    %670 = vmatprep.subr.mxu0 0.0
    %671 = vmatpush1.msra.mxu0 %v40
    %672 = vmatprep.subr.mxu0 0.0
    %673 = vmatpush1.msra.mxu0 %v41
    %674 = vmatprep.subr.mxu0 0.0
    %675 = vmatpush1.msra.mxu0 0.0
    %676 = vmatprep.subr.mxu0 0.0
    %677 = vmatpush1.msra.mxu0 0.0
    %678 = vmatprep.subr.mxu0 0.0
    %679 = vmatpush1.msra.mxu0 0.0
    %680 = vmatprep.subr.mxu0 0.0
    %681 = vmatpush1.msra.mxu0 0.0
    %682 = vmatprep.subr.mxu0 0.0
    %683 = vmatpush1.msra.mxu0 0.0
    %684 = vmatprep.subr.mxu0 0.0
    %685 = vmatpush1.msra.mxu0 0.0
    %686 = vmatprep.subr.mxu0 0.0
    %687 = vmatpush1.msra.mxu0 0.0
    %688 = vmatprep.subr.mxu0 0.0
    %689 = vmatpush1.msra.mxu0 0.0
    %690 = vmatprep.subr.mxu0 0.0
    %691 = vmatpush1.msra.mxu0 0.0
    %692 = vmatprep.subr.mxu0 0.0
    %693 = vmatpush1.msra.mxu0 0.0
    %694 = vmatprep.subr.mxu0 0.0
    %695 = vmatpush1.msra.mxu0 0.0
    %696 = vmatprep.subr.mxu0 0.0
    %697 = vmatpush1.msra.mxu0 0.0
    %698 = vmatprep.subr.mxu0 0.0
    %699 = vmatpush1.msra.mxu0 0.0
    %700 = vmatprep.subr.mxu0 0.0
    %701 = vmatpush1.msra.mxu0 0.0
    %702 = vmatprep.subr.mxu0 0.0
    %703 = vmatpush1.msra.mxu0 0.0
    %704 = vmatprep.subr.mxu0 0.0
    %705 = vmatpush1.msra.mxu0 0.0
    %706 = vmatprep.subr.mxu0 0.0
    %707 = vmatpush1.msra.mxu0 0.0
    %708 = vmatprep.subr.mxu0 0.0
    %709 = vmatpush1.msra.mxu0 0.0
    %710 = vmatprep.subr.mxu0 0.0
    %711 = vmatpush1.msra.mxu0 0.0
    %712 = vmatprep.subr.mxu0 0.0
    %713 = vmatpush1.msra.mxu0 0.0
    %714 = vmatprep.subr.mxu0 0.0
    %715 = vmatpush1.msra.mxu0 0.0
    %716 = vmatprep.subr.mxu0 0.0
    %717 = vmatpush1.msra.mxu0 0.0
    %718 = vmatprep.subr.mxu0 0.0
    %719 = vmatpush1.msra.mxu0 0.0
    %720 = vmatprep.subr.mxu0 0.0
    %721 = vmatpush1.msra.mxu0 0.0
    %722 = vmatprep.subr.mxu0 0.0
    %723 = vmatpush1.msra.mxu0 0.0
    %724 = vmatprep.subr.mxu0 0.0
    %725 = vmatpush1.msra.mxu0 0.0
    %726 = vmatprep.subr.mxu0 0.0
    %727 = vmatpush1.msra.mxu0 0.0
    %728 = vmatprep.subr.mxu0 0.0
    %729 = vmatpush1.msra.mxu0 0.0
    %730 = vmatprep.mubr.f32.mxu0 0.0
    %731 = vmatmul.mubr.f32.gmra.mrb[0].mxu0 %v661
    %v732 = vpop.f32.mrb[0].mxu0
    %v733 = vadd.f32 0.0, %v732
    %v734 = vpop.f32.mrb[0].mxu0
    %735 = vmatprep.mubr.f32.mxu0 0.0
    %736 = vmatmul.mubr.f32.gmra.mrb[0].mxu0 %v664
    %v737 = vpop.f32.mrb[0].mxu0
    %v738 = vadd.f32 0.0, %v737
    %v739 = vpop.f32.mrb[0].mxu0
    %740 = vdwg.mxu0
    %v741 = vmul.f32 %v733, 0.03125
    %v742 = vmul.f32 %v738, 0.03125
    %v743 = vmul.f32 %v741, %v741
    %v744 = vsub.f32 %v742, %v743
    %v745 = vadd.f32 %v744, 1e-05
    %v746 = vrsqrt.pop %v745
    %v748 = vsel %vm236, %v741, 0
    %v751 = vsel %vm236, %v746, 0
    %753 = vmatprep.subr.mxu0 0.0
    %754 = vmatpush1.msra.mxu0 %v245
    %755 = vmatprep.subr.mxu0 0.0
    %756 = vmatpush1.msra.mxu0 0.0
    %757 = vmatprep.subr.mxu0 0.0
    %758 = vmatpush1.msra.mxu0 0.0
    %759 = vmatprep.subr.mxu0 0.0
    %760 = vmatpush1.msra.mxu0 0.0
    %761 = vmatprep.subr.mxu0 0.0
    %762 = vmatpush1.msra.mxu0 0.0
    %763 = vmatprep.subr.mxu0 0.0
    %764 = vmatpush1.msra.mxu0 0.0
    %765 = vmatprep.subr.mxu0 0.0
    %766 = vmatpush1.msra.mxu0 0.0
    %767 = vmatprep.subr.mxu0 0.0
    %768 = vmatpush1.msra.mxu0 0.0
    %769 = vmatprep.subr.mxu0 0.0
    %770 = vmatpush1.msra.mxu0 0.0
    %771 = vmatprep.subr.mxu0 0.0
    %772 = vmatpush1.msra.mxu0 0.0
    %773 = vmatprep.subr.mxu0 0.0
    %774 = vmatpush1.msra.mxu0 0.0
    %775 = vmatprep.subr.mxu0 0.0
    %776 = vmatpush1.msra.mxu0 0.0
    %777 = vmatprep.subr.mxu0 0.0
    %778 = vmatpush1.msra.mxu0 0.0
    %779 = vmatprep.subr.mxu0 0.0
    %780 = vmatpush1.msra.mxu0 0.0
    %781 = vmatprep.subr.mxu0 0.0
    %782 = vmatpush1.msra.mxu0 0.0
    %783 = vmatprep.subr.mxu0 0.0
    %784 = vmatpush1.msra.mxu0 0.0
    %785 = vmatprep.subr.mxu0 0.0
    %786 = vmatpush1.msra.mxu0 0.0
    %787 = vmatprep.subr.mxu0 0.0
    %788 = vmatpush1.msra.mxu0 0.0
    %789 = vmatprep.subr.mxu0 0.0
    %790 = vmatpush1.msra.mxu0 0.0
    %791 = vmatprep.subr.mxu0 0.0
    %792 = vmatpush1.msra.mxu0 0.0
    %793 = vmatprep.subr.mxu0 0.0
    %794 = vmatpush1.msra.mxu0 0.0
    %795 = vmatprep.subr.mxu0 0.0
    %796 = vmatpush1.msra.mxu0 0.0
    %797 = vmatprep.subr.mxu0 0.0
    %798 = vmatpush1.msra.mxu0 0.0
    %799 = vmatprep.subr.mxu0 0.0
    %800 = vmatpush1.msra.mxu0 0.0
    %801 = vmatprep.subr.mxu0 0.0
    %802 = vmatpush1.msra.mxu0 0.0
    %803 = vmatprep.subr.mxu0 0.0
    %804 = vmatpush1.msra.mxu0 0.0
    %805 = vmatprep.subr.mxu0 0.0
    %806 = vmatpush1.msra.mxu0 0.0
    %807 = vmatprep.subr.mxu0 0.0
    %808 = vmatpush1.msra.mxu0 0.0
    %809 = vmatprep.subr.mxu0 0.0
    %810 = vmatpush1.msra.mxu0 0.0
    %811 = vmatprep.subr.mxu0 0.0
    %812 = vmatpush1.msra.mxu0 0.0
    %813 = vmatprep.subr.mxu0 0.0
    %814 = vmatpush1.msra.mxu0 0.0
    %815 = vmatprep.subr.mxu0 0.0
    %816 = vmatpush1.msra.mxu0 0.0
    %817 = vmatprep.mubr.f32.mxu0 0.0
    %818 = vmatmul.mubr.f32.gmra.mrb[0].mxu0 %v748
    %v819 = vpop.f32.mrb[0].mxu0
    %v820 = vadd.f32 0.0, %v819
    %v821 = vpop.f32.mrb[0].mxu0
    %822 = vmatprep.mubr.f32.mxu0 0.0
    %823 = vmatmul.mubr.f32.gmra.mrb[0].mxu0 %v751
    %v824 = vpop.f32.mrb[0].mxu0
    %v825 = vadd.f32 0.0, %v824
    %v826 = vpop.f32.mrb[0].mxu0
    %827 = vdwg.mxu0
    %828 = vmatprep.subr.mxu0 0.0
    %829 = vmatpush1.msra.mxu0 %v820
    %830 = vmatprep.subr.mxu0 0.0
    %831 = vmatpush1.msra.mxu0 %v825
    %832 = vmatprep.subr.mxu0 0.0
    %833 = vmatpush1.msra.mxu0 0.0
    %834 = vmatprep.subr.mxu0 0.0
    %835 = vmatpush1.msra.mxu0 0.0
    %836 = vmatprep.subr.mxu0 0.0
    %837 = vmatpush1.msra.mxu0 0.0
    %838 = vmatprep.subr.mxu0 0.0
    %839 = vmatpush1.msra.mxu0 0.0
    %840 = vmatprep.subr.mxu0 0.0
    %841 = vmatpush1.msra.mxu0 0.0
    %842 = vmatprep.subr.mxu0 0.0
    %843 = vmatpush1.msra.mxu0 0.0
    %844 = vmatprep.subr.mxu0 0.0
    %845 = vmatpush1.msra.mxu0 0.0
    %846 = vmatprep.subr.mxu0 0.0
    %847 = vmatpush1.msra.mxu0 0.0
    %848 = vmatprep.subr.mxu0 0.0
    %849 = vmatpush1.msra.mxu0 0.0
    %850 = vmatprep.subr.mxu0 0.0
    %851 = vmatpush1.msra.mxu0 0.0
    %852 = vmatprep.subr.mxu0 0.0
    %853 = vmatpush1.msra.mxu0 0.0
    %854 = vmatprep.subr.mxu0 0.0
    %855 = vmatpush1.msra.mxu0 0.0
    %856 = vmatprep.subr.mxu0 0.0
    %857 = vmatpush1.msra.mxu0 0.0
    %858 = vmatprep.subr.mxu0 0.0
    %859 = vmatpush1.msra.mxu0 0.0
    %860 = vmatprep.subr.mxu0 0.0
    %861 = vmatpush1.msra.mxu0 0.0
    %862 = vmatprep.subr.mxu0 0.0
    %863 = vmatpush1.msra.mxu0 0.0
    %864 = vmatprep.subr.mxu0 0.0
    %865 = vmatpush1.msra.mxu0 0.0
    %866 = vmatprep.subr.mxu0 0.0
    %867 = vmatpush1.msra.mxu0 0.0
    %868 = vmatprep.subr.mxu0 0.0
    %869 = vmatpush1.msra.mxu0 0.0
    %870 = vmatprep.subr.mxu0 0.0
    %871 = vmatpush1.msra.mxu0 0.0
    %872 = vmatprep.subr.mxu0 0.0
    %873 = vmatpush1.msra.mxu0 0.0
    %874 = vmatprep.subr.mxu0 0.0
    %875 = vmatpush1.msra.mxu0 0.0
    %876 = vmatprep.subr.mxu0 0.0
    %877 = vmatpush1.msra.mxu0 0.0
    %878 = vmatprep.subr.mxu0 0.0
    %879 = vmatpush1.msra.mxu0 0.0
    %880 = vmatprep.subr.mxu0 0.0
    %881 = vmatpush1.msra.mxu0 0.0
    %882 = vmatprep.subr.mxu0 0.0
    %883 = vmatpush1.msra.mxu0 0.0
    %884 = vmatprep.subr.mxu0 0.0
    %885 = vmatpush1.msra.mxu0 0.0
    %886 = vmatprep.subr.mxu0 0.0
    %887 = vmatpush1.msra.mxu0 0.0
    %888 = vmatprep.subr.mxu0 0.0
    %889 = vmatpush1.msra.mxu0 0.0
    %890 = vmatprep.subr.mxu0 0.0
    %891 = vmatpush1.msra.mxu0 0.0
    %892 = vmatprep.mubr.f32.mxu0 0.0
    %893 = vmatmul.mubr.f32.gmra.mrb[0].mxu0 %v324
    %v894 = vpop.f32.mrb[0].mxu0
    %v895 = vadd.f32 0.0, %v894
    %v896 = vpop.f32.mrb[0].mxu0
    %897 = vmatprep.mubr.f32.mxu0 0.0
    %898 = vmatmul.mubr.f32.gmra.mrb[0].mxu0 %v327
    %v899 = vpop.f32.mrb[0].mxu0
    %v900 = vadd.f32 0.0, %v899
    %v901 = vpop.f32.mrb[0].mxu0
    %902 = vmatprep.mubr.f32.mxu0 0.0
    %903 = vmatmul.mubr.f32.gmra.mrb[0].mxu0 %v330
    %v904 = vpop.f32.mrb[0].mxu0
    %v905 = vadd.f32 0.0, %v904
    %v906 = vpop.f32.mrb[0].mxu0
    %907 = vmatprep.mubr.f32.mxu0 0.0
    %908 = vmatmul.mubr.f32.gmra.mrb[0].mxu0 %v333
    %v909 = vpop.f32.mrb[0].mxu0
    %v910 = vadd.f32 0.0, %v909
    %v911 = vpop.f32.mrb[0].mxu0
    %912 = vdwg.mxu0
    %v913 = vsub.f32 %v575, %v895
    %v914 = vsub.f32 %v580, %v900
    %915 = vset.pattern.permute.xlu0 3
    %916 = vperm.xlu0 %915, %v43
    %v917 = vpop.permute.xlu0 %916
    %919 = vset.pattern.permute.xlu0 3
    %920 = vperm.xlu0 %919, %v44
    %v921 = vpop.permute.xlu0 %920
    %v923 = vmul.f32 %v905, %v917
    %v924 = vmul.f32 %v910, %v921
    %v925 = vmul.f32 %v913, %v923
    %v926 = vmul.f32 %v914, %v924
    %927 = vset.pattern.permute.xlu0 4
    %928 = vperm.xlu0 %927, %v43
    %v929 = vpop.permute.xlu0 %928
    %931 = vset.pattern.permute.xlu0 4
    %932 = vperm.xlu0 %931, %v44
    %v933 = vpop.permute.xlu0 %932
    %v935 = vadd.f32 %v925, %v929
    %v936 = vadd.f32 %v926, %v933
    %v937 = vxor.u32 %v935, 2147483648
    %v938 = vxor.u32 %v936, 2147483648
    %v939 = vmul.f32 %v937, 1.442695
    %v940 = vpow.pop %v939
    %v941 = vmul.f32 %v938, 1.442695
    %v942 = vpow.pop %v941
    %v943 = vadd.f32 %v940, 1.0
    %v944 = vadd.f32 %v942, 1.0
    %v945 = vrcp.pop %v943
    %v946 = vmul.f32 1.0, %v945
    %v947 = vrcp.pop %v944
    %v948 = vmul.f32 1.0, %v947
    %v949 = vmul.f32 %v935, %v946
    %v950 = vmul.f32 %v936, %v948
    %951 = vrot.lane.b32.xlu0 %v949, 32
    %v952 = vpop.permute.xlu0 %951
    %v953 = vsel %vm460, %v952, %v949
    %954 = vrot.lane.b32.xlu0 %v950, 32
    %v955 = vpop.permute.xlu0 %954
    %v956 = vsel %vm460, %v955, %v950
    %957 = vrot.lane.b32.xlu0 %v953, 32
    %v958 = vpop.permute.xlu0 %957
    %959 = vrot.lane.b32.xlu0 %v956, 32
    %v960 = vpop.permute.xlu0 %959
    %v961 = vsel %vm460, %v958, %v949
    %v962 = vsel %vm460, %v960, %v950
    %965 = vrot.lane.b32.xlu0 %v961, 97
    %v966 = vpop.permute.xlu0 %965
    %967 = vrot.lane.b32.xlu0 %v962, 97
    %v968 = vpop.permute.xlu0 %967
    %v971 = vmul.f32 %v61, %v966
    %v972 = vmul.f32 %v61, %v968
    %973 = vrot.lane.b32.xlu0 %v961, 127
    %v974 = vpop.permute.xlu0 %973
    %975 = vrot.lane.b32.xlu0 %v962, 127
    %v976 = vpop.permute.xlu0 %975
    %v979 = vmul.f32 %v64, %v974
    %v980 = vmul.f32 %v64, %v976
    %v981 = vld [vmem:[%s7] sm:$0xff]
    %v982 = vld [vmem:[%s7 + $0x8] sm:$0xff]
    %983 = vset.pattern.permute.xlu0 5
    %984 = vperm.xlu0 %983, %v43
    %v985 = vpop.permute.xlu0 %984
    %987 = vset.pattern.permute.xlu0 5
    %988 = vperm.xlu0 %987, %v44
    %v989 = vpop.permute.xlu0 %988
    %v992 = vsel %vm501, %v981, 0
    %v995 = vsel %vm501, %v982, 0
    %997 = vmatprep.subr.mxu0 0.0
    %998 = vmatpush1.msra.mxu0 %v971
    %999 = vmatprep.subr.mxu0 0.0
    %1000 = vmatpush1.msra.mxu0 %v972
    %1001 = vmatprep.subr.mxu0 0.0
    %1002 = vmatpush1.msra.mxu0 %v949
    %1003 = vmatprep.subr.mxu0 0.0
    %1004 = vmatpush1.msra.mxu0 %v950
    %1005 = vmatprep.subr.mxu0 0.0
    %1006 = vmatpush1.msra.mxu0 %v979
    %1007 = vmatprep.subr.mxu0 0.0
    %1008 = vmatpush1.msra.mxu0 %v980
    %1009 = vmatprep.subr.mxu0 0.0
    %1010 = vmatpush1.msra.mxu0 0.0
    %1011 = vmatprep.subr.mxu0 0.0
    %1012 = vmatpush1.msra.mxu0 0.0
    %1013 = vmatprep.subr.mxu0 0.0
    %1014 = vmatpush1.msra.mxu0 0.0
    %1015 = vmatprep.subr.mxu0 0.0
    %1016 = vmatpush1.msra.mxu0 0.0
    %1017 = vmatprep.subr.mxu0 0.0
    %1018 = vmatpush1.msra.mxu0 0.0
    %1019 = vmatprep.subr.mxu0 0.0
    %1020 = vmatpush1.msra.mxu0 0.0
    %1021 = vmatprep.subr.mxu0 0.0
    %1022 = vmatpush1.msra.mxu0 0.0
    %1023 = vmatprep.subr.mxu0 0.0
    %1024 = vmatpush1.msra.mxu0 0.0
    %1025 = vmatprep.subr.mxu0 0.0
    %1026 = vmatpush1.msra.mxu0 0.0
    %1027 = vmatprep.subr.mxu0 0.0
    %1028 = vmatpush1.msra.mxu0 0.0
    %1029 = vmatprep.subr.mxu0 0.0
    %1030 = vmatpush1.msra.mxu0 0.0
    %1031 = vmatprep.subr.mxu0 0.0
    %1032 = vmatpush1.msra.mxu0 0.0
    %1033 = vmatprep.subr.mxu0 0.0
    %1034 = vmatpush1.msra.mxu0 0.0
    %1035 = vmatprep.subr.mxu0 0.0
    %1036 = vmatpush1.msra.mxu0 0.0
    %1037 = vmatprep.subr.mxu0 0.0
    %1038 = vmatpush1.msra.mxu0 0.0
    %1039 = vmatprep.subr.mxu0 0.0
    %1040 = vmatpush1.msra.mxu0 0.0
    %1041 = vmatprep.subr.mxu0 0.0
    %1042 = vmatpush1.msra.mxu0 0.0
    %1043 = vmatprep.subr.mxu0 0.0
    %1044 = vmatpush1.msra.mxu0 0.0
    %1045 = vmatprep.subr.mxu0 0.0
    %1046 = vmatpush1.msra.mxu0 0.0
    %1047 = vmatprep.subr.mxu0 0.0
    %1048 = vmatpush1.msra.mxu0 0.0
    %1049 = vmatprep.subr.mxu0 0.0
    %1050 = vmatpush1.msra.mxu0 0.0
    %1051 = vmatprep.subr.mxu0 0.0
    %1052 = vmatpush1.msra.mxu0 0.0
    %1053 = vmatprep.subr.mxu0 0.0
    %1054 = vmatpush1.msra.mxu0 0.0
    %1055 = vmatprep.subr.mxu0 0.0
    %1056 = vmatpush1.msra.mxu0 0.0
    %1057 = vmatprep.subr.mxu0 0.0
    %1058 = vmatpush1.msra.mxu0 0.0
    %1059 = vmatprep.subr.mxu0 0.0
    %1060 = vmatpush1.msra.mxu0 0.0
    %1061 = vmatprep.mubr.f32.mxu0 0.0
    %1062 = vmatmul.mubr.f32.gmra.mrb[0].mxu0 %v992
    %v1063 = vpop.f32.mrb[0].mxu0
    %v1064 = vadd.f32 %v985, %v1063
    %v1065 = vpop.f32.mrb[0].mxu0
    %1066 = vmatprep.mubr.f32.mxu0 0.0
    %1067 = vmatmul.mubr.f32.gmra.mrb[0].mxu0 %v995
    %v1068 = vpop.f32.mrb[0].mxu0
    %v1069 = vadd.f32 %v989, %v1068
    %v1070 = vpop.f32.mrb[0].mxu0
    %1071 = vdwg.mxu0
    %v1072 = vadd.f32 %v30, %v1064
    %v1073 = vadd.f32 %v31, %v1069
    %1074 = vst.msk [vmem:[#allocation2] sm:$0xff] %vm67, %v1072
    %1075 = vst.msk [vmem:[#allocation2 + $0x8] sm:$0xff] %vm67, %v1073
    // Predicated region
    $region34: #{tpu_custom_call.1} parent=1 // pred_check
      _
    $region35: #{tpu_custom_call.1} parent=1 // pred_check_branch
      %1077 = sbr.rel (0) target = $region37
    $region36: #{tpu_custom_call.1} parent=1 // pred_region
      %s1079 = ssub.s32 256, 256
      %1080 = vsyncadd [#allocation3], %s1079
      %s1081 = sshll.u32 [#allocation2], 4
      %s1082 = int_to_ptr.vmem [resolvable:$true] %s1081
      %1087 = dma.vmem_to_hbm [thread:$0]  %s1082, 256, %s8, [#allocation3], 128, 128, 8
    $region37: #{tpu_custom_call.1} parent=1 // pred_fallthru
      _
    // Predicated region
    $region38: #{tpu_custom_call.1} parent=1 // pred_check
      _
    $region39: #{tpu_custom_call.1} parent=1 // pred_check_branch
      %1089 = sbr.rel (0) target = $region41
    $region40: #{tpu_custom_call.1} parent=1 // pred_region
      %1090 = dma.done [#allocation3], 256
    $region41: #{tpu_custom_call.1} parent=1 // pred_fallthru
      _
    %1091 = vsyncpa [#allocation3], 1

</llo_original>
